<compile_context>
chip_gen: v7x
topology: tpu7x:2x2x1
jax: 0.10.0
libtpu: 0.0.40
codegen_flags: <defaults>
</compile_context>

<pallas_src>
import functools
import math

import jax
import jax.numpy as jnp
from jax.experimental import pallas as pl
from jax.experimental.pallas import tpu as pltpu


# Below this size the pallas_call fixed overhead dominates the copy itself:
# just return the (zero-cost) reshape.
_SMALL_BYPASS_BYTES = 1 << 20  # 1 MiB


def _flatten_copy_kernel(chunks, x_hbm, o_hbm, sems):
    """K outstanding HBM->HBM DMAs over contiguous row ranges of (N, F)."""
    copies = []
    for i, (start, size) in enumerate(chunks):
        cp = pltpu.make_async_copy(
            x_hbm.at[pl.ds(start, size)],   # (size, F) HBM view, static slice
            o_hbm.at[pl.ds(start, size)],
            sems.at[i],
        )
        cp.start()                          # issue all descriptors first ...
        copies.append(cp)
    for cp in copies:
        cp.wait()                           # ... then drain them


def flatten_pallas(x, *, num_chunks=8, force_kernel=False):
    """Equivalent of torch Flatten.forward: x.view(x.shape[0], -1)."""
    n = x.shape[0]
    f = math.prod(x.shape[1:]) if len(x.shape) > 1 else 1

    # Metadata-only row-major collapse (== torch .view on a contiguous tensor).
    x2d = jnp.reshape(x, (n, f))

    nbytes = n * f * jnp.dtype(x.dtype).itemsize

    # Highest-value optimization: no data movement at all when we can avoid it.
    if not force_kernel and nbytes < _SMALL_BYPASS_BYTES:
        return x2d

    # Chunk the copy along the leading (batch) dimension so several DMA
    # descriptors are in flight at once.
    k = max(1, min(num_chunks, n))
    base, rem = divmod(n, k)
    chunks = []
    start = 0
    for i in range(k):
        size = base + (1 if i < rem else 0)
        if size == 0:
            continue
        chunks.append((start, size))
        start += size

    kernel = functools.partial(_flatten_copy_kernel, tuple(chunks))

    out = pl.pallas_call(
        kernel,
        out_shape=jax.ShapeDtypeStruct((n, f), x.dtype),
        in_specs=[pl.BlockSpec(memory_space=pl.ANY)],   # raw HBM ref, no auto-DMA
        out_specs=pl.BlockSpec(memory_space=pl.ANY),    # raw HBM ref, no auto-DMA
        scratch_shapes=[pltpu.SemaphoreType.DMA((len(chunks),))],
        cost_estimate=pl.CostEstimate(
            flops=0, transcendentals=0, bytes_accessed=2 * nbytes
        ),
    )(x2d)
    return out


if __name__ == "__main__":
    key = jax.random.PRNGKey(0)
    # Small NCHW input consistent with a conv-feature-map flatten.
    x = jax.random.normal(key, (2, 4, 16, 16), dtype=jnp.float32)
    y_ref = jnp.reshape(x, (x.shape[0], -1))

    # Default path: small tensor -> zero-cost bypass (no kernel launch).
    y_fast = flatten_pallas(x)
    jax.block_until_ready(y_fast)
    assert y_fast.shape == (2, 4 * 16 * 16)
    assert y_fast.dtype == x.dtype
    assert bool(jnp.all(y_fast == y_ref))

    # Forced kernel path: exercises the chunked multi-DMA Pallas kernel once.
    y_kern = flatten_pallas(x, force_kernel=True)
    jax.block_until_ready(y_kern)
    assert y_kern.shape == (2, 4 * 16 * 16)
    assert y_kern.dtype == x.dtype
    assert bool(jnp.all(y_kern == y_ref))

    print("KERNEL_OK")
</pallas_src>

<mosaic_0001>
module attributes {stable_mosaic.version = 11 : i64} {
  func.func @_flatten_copy_kernel(%arg0: memref<2x1024xf32, #tpu.memory_space<any>>, %arg1: memref<2x1024xf32, #tpu.memory_space<any>>, %arg2: memref<2x!tpu.dma_semaphore, #tpu.memory_space<semaphore_mem>>) attributes {dimension_semantics = [], scalar_prefetch = 0 : i64, scratch_operands = 1 : i64, tpu.core_type = #tpu.core_type<tc>} {
    %c0_i32 = arith.constant 0 : i32
    %c0_i32_0 = arith.constant 0 : i32
    %c0_i32_1 = arith.constant 0 : i32
    %0 = tpu.memref_slice %arg0[%c0_i32_0, %c0_i32_1] : memref<2x1024xf32, #tpu.memory_space<any>> -> memref<1x1024xf32, #tpu.memory_space<any>>
    %c0_i32_2 = arith.constant 0 : i32
    %c0_i32_3 = arith.constant 0 : i32
    %1 = tpu.memref_slice %arg1[%c0_i32_2, %c0_i32_3] : memref<2x1024xf32, #tpu.memory_space<any>> -> memref<1x1024xf32, #tpu.memory_space<any>>
    %2 = tpu.memref_slice %arg2[%c0_i32] : memref<2x!tpu.dma_semaphore, #tpu.memory_space<semaphore_mem>> -> memref<1x!tpu.dma_semaphore, #tpu.memory_space<semaphore_mem>>
    %3 = tpu.memref_squeeze %2 : memref<1x!tpu.dma_semaphore, #tpu.memory_space<semaphore_mem>> -> memref<!tpu.dma_semaphore, #tpu.memory_space<semaphore_mem>>
    tpu.enqueue_dma source(%0 : memref<1x1024xf32, #tpu.memory_space<any>>) target(%1 : memref<1x1024xf32, #tpu.memory_space<any>>) target_semaphore(%3 : memref<!tpu.dma_semaphore, #tpu.memory_space<semaphore_mem>>)
    %c1_i32 = arith.constant 1 : i32
    %c1_i32_4 = arith.constant 1 : i32
    %c0_i32_5 = arith.constant 0 : i32
    %4 = tpu.memref_slice %arg0[%c1_i32_4, %c0_i32_5] : memref<2x1024xf32, #tpu.memory_space<any>> -> memref<1x1024xf32, #tpu.memory_space<any>>
    %c1_i32_6 = arith.constant 1 : i32
    %c0_i32_7 = arith.constant 0 : i32
    %5 = tpu.memref_slice %arg1[%c1_i32_6, %c0_i32_7] : memref<2x1024xf32, #tpu.memory_space<any>> -> memref<1x1024xf32, #tpu.memory_space<any>>
    %6 = tpu.memref_slice %arg2[%c1_i32] : memref<2x!tpu.dma_semaphore, #tpu.memory_space<semaphore_mem>> -> memref<1x!tpu.dma_semaphore, #tpu.memory_space<semaphore_mem>>
    %7 = tpu.memref_squeeze %6 : memref<1x!tpu.dma_semaphore, #tpu.memory_space<semaphore_mem>> -> memref<!tpu.dma_semaphore, #tpu.memory_space<semaphore_mem>>
    tpu.enqueue_dma source(%4 : memref<1x1024xf32, #tpu.memory_space<any>>) target(%5 : memref<1x1024xf32, #tpu.memory_space<any>>) target_semaphore(%7 : memref<!tpu.dma_semaphore, #tpu.memory_space<semaphore_mem>>)
    %c0_i32_8 = arith.constant 0 : i32
    %c0_i32_9 = arith.constant 0 : i32
    %c0_i32_10 = arith.constant 0 : i32
    %8 = tpu.memref_slice %arg0[%c0_i32_9, %c0_i32_10] : memref<2x1024xf32, #tpu.memory_space<any>> -> memref<1x1024xf32, #tpu.memory_space<any>>
    %c0_i32_11 = arith.constant 0 : i32
    %c0_i32_12 = arith.constant 0 : i32
    %9 = tpu.memref_slice %arg1[%c0_i32_11, %c0_i32_12] : memref<2x1024xf32, #tpu.memory_space<any>> -> memref<1x1024xf32, #tpu.memory_space<any>>
    %10 = tpu.memref_slice %arg2[%c0_i32_8] : memref<2x!tpu.dma_semaphore, #tpu.memory_space<semaphore_mem>> -> memref<1x!tpu.dma_semaphore, #tpu.memory_space<semaphore_mem>>
    %11 = tpu.memref_squeeze %10 : memref<1x!tpu.dma_semaphore, #tpu.memory_space<semaphore_mem>> -> memref<!tpu.dma_semaphore, #tpu.memory_space<semaphore_mem>>
    tpu.wait_dma2 semaphore(%11 : memref<!tpu.dma_semaphore, #tpu.memory_space<semaphore_mem>>) src(%8 : memref<1x1024xf32, #tpu.memory_space<any>>) dst(%9 : memref<1x1024xf32, #tpu.memory_space<any>>)
    %c1_i32_13 = arith.constant 1 : i32
    %c1_i32_14 = arith.constant 1 : i32
    %c0_i32_15 = arith.constant 0 : i32
    %12 = tpu.memref_slice %arg0[%c1_i32_14, %c0_i32_15] : memref<2x1024xf32, #tpu.memory_space<any>> -> memref<1x1024xf32, #tpu.memory_space<any>>
    %c1_i32_16 = arith.constant 1 : i32
    %c0_i32_17 = arith.constant 0 : i32
    %13 = tpu.memref_slice %arg1[%c1_i32_16, %c0_i32_17] : memref<2x1024xf32, #tpu.memory_space<any>> -> memref<1x1024xf32, #tpu.memory_space<any>>
    %14 = tpu.memref_slice %arg2[%c1_i32_13] : memref<2x!tpu.dma_semaphore, #tpu.memory_space<semaphore_mem>> -> memref<1x!tpu.dma_semaphore, #tpu.memory_space<semaphore_mem>>
    %15 = tpu.memref_squeeze %14 : memref<1x!tpu.dma_semaphore, #tpu.memory_space<semaphore_mem>> -> memref<!tpu.dma_semaphore, #tpu.memory_space<semaphore_mem>>
    tpu.wait_dma2 semaphore(%15 : memref<!tpu.dma_semaphore, #tpu.memory_space<semaphore_mem>>) src(%12 : memref<1x1024xf32, #tpu.memory_space<any>>) dst(%13 : memref<1x1024xf32, #tpu.memory_space<any>>)
    return
  }
}

</mosaic_0001>

<llo_original>
// kernel: tpu_custom_call.1
$region0: #{tpu_custom_call.1}
  #allocation0 [shape = 'u32[]', space=smem, size = 0x4, offset = 0x4, fixed_abs, tag = 'smem constant byte address 0x4 - core index']
  #allocation1 [shape = 'u32[144,128]{1,0:T(1,128)}', space=vmem, size = 0x12000, scoped, tag = 'internal scratch']
  #allocation2 [shape = 's32[2]{0}', space=sflag, size = 0x8, scoped, tag = 'scratch operand']
  #allocation3 [shape = 's32[]', space=sflag, size = 0x4, offset = 0, fixed_abs, tag = 'sflag constant byte address 0x0 - dummy sync flag']
  #allocation5 [shape = 's32[]', space=sflag, size = 0x4, offset = 0, fixed_abs, tag = 'sflag constant byte address 0x0 - dummy sync flag']
  %s0 = inlined_call_operand.hbm [shape: f32[2,1024], index: 0, kind: input, shape index: {}]
  %s1 = inlined_call_operand.hbm [shape: f32[2,1024], index: 1, kind: output, shape index: {}]
  %s2 = sld [smem:[#allocation0]]
  $region2: #{tpu_custom_call.1} parent=0
    _
  %s4 = ssub.s32 1, %s2
  %s5 = scalar_select 0, %s4, %s2
  $region1: #{tpu_custom_call.1} parent=0
    #allocation4 [shape = 'u32[3]{0}', space=smem, size = 0xc, scoped, tag = 'DMA stride descriptor']
    #allocation6 [shape = 'u32[3]{0}', space=smem, size = 0xc, scoped, tag = 'DMA stride descriptor']
    %s7 = sshll.u32 1, 14
    %s8 = sxor.u32 4294967295, %s7
    %s11 = sshll.u32 3, 24
    %s12 = sxor.u32 4294967295, %s11
    %s13 = sand.u32 0, %s12
    %s15 = sor.u32 %s13, 0
    %18 = sst [smem:[#allocation4]] 32
    %s19 = scalar_lea.smem [#allocation4], 1
    %20 = sst [smem:[%s19]] 32
    %s21 = scalar_lea.smem [#allocation4], 2
    %22 = sst [smem:[%s21]] 1
    %24 = dma.general %s0, 128, %s1, [#allocation2], [#allocation3], [#allocation4], %s15, 0
    %s25 = scalar_lea.hbm %s0, 16
    %s26 = scalar_lea.hbm %s1, 16
    %s27 = scalar_lea.sflag [#allocation2], 1
    %s29 = sshll.u32 1, 14
    %s30 = sxor.u32 4294967295, %s29
    %s33 = sshll.u32 3, 24
    %s34 = sxor.u32 4294967295, %s33
    %s35 = sand.u32 0, %s34
    %s37 = sor.u32 %s35, 0
    %40 = sst [smem:[#allocation6]] 32
    %s41 = scalar_lea.smem [#allocation6], 1
    %42 = sst [smem:[%s41]] 32
    %s43 = scalar_lea.smem [#allocation6], 2
    %44 = sst [smem:[%s43]] 1
    %46 = dma.general %s25, 128, %s26, %s27, [#allocation5], [#allocation6], %s37, 0
    %s47 = smul.u32 1, 8
    %s48 = sshll.u32 %s47, 4
    %49 = dma.done [#allocation2], %s48
    %s50 = sshll.u32 %s47, 4
    %51 = dma.done %s27, %s50
  %52 = vsyncmov [#allocation2]
  %s53 = vpop.sfrf %52
  %p54 = scmp.eq.s32.totalorder %s53, 0
  %p55 = pneg %p54
  %57 = shalt.err (%p55)
  %s58 = scalar_lea.sflag [#allocation2], 1
  %59 = vsyncmov %s58
  %s60 = vpop.sfrf %59
  %p61 = scmp.eq.s32.totalorder %s60, 0
  %p62 = pneg %p61
  %64 = shalt.err (%p62)

</llo_original>
